<compile_context>
chip_gen: v6e
topology: v6e:2x2x1
jax: 0.10.0
libtpu: 0.0.40
codegen_flags: <defaults>
</compile_context>

<pallas_src>
import functools
import math

import jax
import jax.numpy as jnp
from jax import lax
from jax.experimental import pallas as pl
from jax.experimental.pallas import tpu as pltpu

_N_OUT = 10     # nn.Linear(d_model, 10)
_N_PAD = 128    # lane-dense padded output width
_LN_EPS = 1e-5  # nn.LayerNorm default


def _round_up(x, m):
    return ((x + m - 1) // m) * m


def _layer_norm(h, gamma, beta, eps=_LN_EPS):
    # Two-pass (centered) form: matches the reference numerics more closely
    # than E[h^2] - E[h]^2 and avoids cancellation at 1e-4 tolerance.
    mu = jnp.mean(h, axis=-1, keepdims=True)
    d = h - mu
    var = jnp.mean(d * d, axis=-1, keepdims=True)
    return d * lax.rsqrt(var + eps) * gamma + beta


def _mpd_kernel(x_ref,
                w12_ref, b12_ref, a_ref,
                g1_ref, be1_ref, g2_ref, be2_ref,
                wo1_ref, wo2_ref, bo_ref,
                o_ref, acc_ref):
    k = pl.program_id(1)

    @pl.when(k == 0)
    def _():
        acc_ref[...] = jnp.zeros_like(acc_ref)

    # Dominant matmul: (tm, tk) @ (tk, d_model) on the MXU, f32 accumulation
    # (inputs may be bf16 when matmul_dtype=jnp.bfloat16).
    acc_ref[...] += jnp.dot(x_ref[...], w12_ref[...],
                            preferred_element_type=jnp.float32)

    @pl.when(k == pl.num_programs(1) - 1)
    def _():
        half = g1_ref.shape[-1]
        h = acc_ref[...] + b12_ref[...]

        # ---- path 1: PReLU -> LayerNorm on the first half of the lanes ----
        h1 = h[:, :half]
        alpha = a_ref[0, 0]                       # scalar read from SMEM
        h1 = jnp.where(h1 > 0, h1, alpha * h1)
        p1 = _layer_norm(h1, g1_ref[...], be1_ref[...])

        # ---- path 2: exact-erf GELU -> LayerNorm on the second half ----
        h2 = h[:, half:]
        h2 = 0.5 * h2 * (1.0 + lax.erf(h2 * 0.7071067811865476))
        p2 = _layer_norm(h2, g2_ref[...], be2_ref[...])

        # ---- concat-free output projection into a lane-dense 128 slab ----
        out = (jnp.dot(p1, wo1_ref[...], preferred_element_type=jnp.float32)
               + jnp.dot(p2, wo2_ref[...], preferred_element_type=jnp.float32)
               + bo_ref[...])
        o_ref[...] = out.astype(o_ref.dtype)


def _vmem_capacity_bytes():
    try:
        cap = getattr(pltpu.get_tpu_info(), "vmem_capacity_bytes", None)
        if cap:
            return int(cap)
    except Exception:
        pass
    return 64 << 20   # conservative fallback (v7x per-TensorCore VMEM)


@functools.partial(jax.jit, static_argnames=("matmul_dtype",))
def multi_path_decoder(x, params, matmul_dtype=jnp.float32):
    """x: (..., d_model) float32.  Returns (..., 10) float32."""
    *lead, d_model = x.shape
    half = d_model // 2
    rows = int(math.prod(lead)) if lead else 1
    x2 = x.reshape(rows, d_model)

    mm_bytes = jnp.dtype(matmul_dtype).itemsize
    vmem_cap = int(0.75 * _vmem_capacity_bytes())

    # ---- K tiling: stream (tk, d_model) slices of [W1|W2] when the fully
    # resident weight would eat too much VMEM (large d_model on v7x). ----
    tk = d_model
    if d_model % 256 == 0 and d_model * d_model * mm_bytes > vmem_cap // 3:
        while (tk > 256 and (tk // 2) % 128 == 0
               and 2 * tk * d_model * mm_bytes > vmem_cap // 3):
            tk //= 2
    nk = d_model // tk

    # ---- row tile: large (amortize per-step overhead / fill MXU M), but at
    # least 2 row-grid steps so both v7x TensorCores get work. ----
    tm = min(1024, max(8, rows))
    if rows >= 16:
        tm = min(tm, _round_up(-(-rows // 2), 8))
    tm = _round_up(tm, 8)

    def vmem_est(tm_):
        w_bufs = 1 if nk == 1 else 2
        return (2 * tm_ * tk * mm_bytes              # x tiles (double buffered)
                + w_bufs * tk * d_model * mm_bytes   # [W1|W2] tiles
                + tm_ * d_model * 4                  # h accumulator scratch
                + 2 * tm_ * _N_PAD * 4               # output tiles
                + d_model * _N_PAD * 4               # Wo halves (single buf)
                + 8 * d_model * 4                    # b12 / LN params
                + 4 * tm_ * d_model * 4              # live epilogue temps
                + (4 << 20))                         # compiler scratch headroom

    while tm > 8 and vmem_est(tm) > vmem_cap:
        tm = max(8, _round_up(tm // 2, 8))

    padded_rows = _round_up(rows, tm)
    if padded_rows != rows:
        x2 = jnp.pad(x2, ((0, padded_rows - rows), (0, 0)))

    # ---- weight prep (fused / lane-padded; constant-folded under jit) ----
    w12 = jnp.concatenate([params["w1"], params["w2"]], axis=1)      # (d, d)
    b12 = jnp.concatenate([params["b1"], params["b2"]], axis=1)      # (1, d)
    wo_pad = jnp.pad(params["wo"], ((0, 0), (0, _N_PAD - _N_OUT)))   # (d, 128)
    wo1, wo2 = wo_pad[:half], wo_pad[half:]
    bo_pad = jnp.pad(params["bo"], ((0, 0), (0, _N_PAD - _N_OUT)))   # (1, 128)

    x2 = x2.astype(matmul_dtype)
    w12 = w12.astype(matmul_dtype)

    invariant = dict(pipeline_mode=pl.Buffered(1))   # grid-invariant operands
    full = lambda i, k: (0, 0)

    if nk == 1:
        w12_spec = pl.BlockSpec((tk, d_model), lambda i, k: (k, 0), **invariant)
    else:
        w12_spec = pl.BlockSpec((tk, d_model), lambda i, k: (k, 0))

    in_specs = [
        pl.BlockSpec((tm, tk), lambda i, k: (i, k)),               # x tile
        w12_spec,                                                  # [W1|W2]
        pl.BlockSpec((1, d_model), full, **invariant),             # b12
        pl.BlockSpec(memory_space=pltpu.MemorySpace.SMEM),         # PReLU alpha
        pl.BlockSpec((1, half), full, **invariant),                # gamma1
        pl.BlockSpec((1, half), full, **invariant),                # beta1
        pl.BlockSpec((1, half), full, **invariant),                # gamma2
        pl.BlockSpec((1, half), full, **invariant),                # beta2
        pl.BlockSpec((half, _N_PAD), full, **invariant),           # Wo top
        pl.BlockSpec((half, _N_PAD), full, **invariant),           # Wo bottom
        pl.BlockSpec((1, _N_PAD), full, **invariant),              # bo (padded)
    ]

    out_padded = pl.pallas_call(
        _mpd_kernel,
        out_shape=jax.ShapeDtypeStruct((padded_rows, _N_PAD), jnp.float32),
        grid_spec=pltpu.PrefetchScalarGridSpec(
            num_scalar_prefetch=0,
            grid=(padded_rows // tm, nk),
            in_specs=in_specs,
            out_specs=pl.BlockSpec((tm, _N_PAD), lambda i, k: (i, 0)),
            scratch_shapes=[pltpu.VMEM((tm, d_model), jnp.float32)]),
        compiler_params=pltpu.CompilerParams(
            dimension_semantics=("parallel", "arbitrary"),
            vmem_limit_bytes=vmem_cap),
    )(x2, w12, b12, params["alpha"],
      params["g1"], params["be1"], params["g2"], params["be2"],
      wo1, wo2, bo_pad)

    # TODO(synk): fuse the consumer (or return the padded slab) instead of
    # this HBM re-read slice when the decoder output feeds another kernel.
    out = out_padded[:rows, :_N_OUT]
    return out.reshape(tuple(lead) + (_N_OUT,))


def init_params(key, d_model):
    half = d_model // 2
    ks = jax.random.split(key, 6)
    scale = 1.0 / jnp.sqrt(d_model)
    return {
        "w1": jax.random.uniform(ks[0], (d_model, half), jnp.float32, -scale, scale),
        "b1": jax.random.uniform(ks[1], (1, half), jnp.float32, -scale, scale),
        "alpha": jnp.full((1, 1), 0.25, jnp.float32),        # PReLU default
        "g1": jnp.ones((1, half), jnp.float32),
        "be1": jnp.zeros((1, half), jnp.float32),
        "w2": jax.random.uniform(ks[2], (d_model, half), jnp.float32, -scale, scale),
        "b2": jax.random.uniform(ks[3], (1, half), jnp.float32, -scale, scale),
        "g2": jnp.ones((1, half), jnp.float32),
        "be2": jnp.zeros((1, half), jnp.float32),
        "wo": jax.random.uniform(ks[4], (d_model, _N_OUT), jnp.float32, -scale, scale),
        "bo": jax.random.uniform(ks[5], (1, _N_OUT), jnp.float32, -scale, scale),
    }


def reference(x, p):
    h1 = x @ p["w1"] + p["b1"]
    h1 = jnp.where(h1 > 0, h1, p["alpha"][0, 0] * h1)
    mu = jnp.mean(h1, -1, keepdims=True)
    v = jnp.mean((h1 - mu) ** 2, -1, keepdims=True)
    p1 = (h1 - mu) / jnp.sqrt(v + _LN_EPS) * p["g1"] + p["be1"]

    h2 = x @ p["w2"] + p["b2"]
    h2 = 0.5 * h2 * (1.0 + lax.erf(h2 / jnp.sqrt(2.0)))
    mu2 = jnp.mean(h2, -1, keepdims=True)
    v2 = jnp.mean((h2 - mu2) ** 2, -1, keepdims=True)
    p2 = (h2 - mu2) / jnp.sqrt(v2 + _LN_EPS) * p["g2"] + p["be2"]

    return jnp.concatenate([p1, p2], -1) @ p["wo"] + p["bo"]


if __name__ == "__main__":
    key = jax.random.PRNGKey(0)
    batch, seq, d_model = 2, 8, 32
    kx, kp = jax.random.split(key)
    x = jax.random.normal(kx, (batch, seq, d_model), jnp.float32)
    params = init_params(kp, d_model)

    ref = reference(x, params)

    # Exact f32 path (matches the PyTorch module at 1e-4).
    out = jax.block_until_ready(multi_path_decoder(x, params))
    assert out.shape == (batch, seq, _N_OUT)
    err = float(jnp.max(jnp.abs(out - ref)))
    assert jnp.allclose(out, ref, atol=1e-4, rtol=1e-4), err

    # bf16 MXU path for the dominant matmul (relaxed tolerance).
    out_bf = jax.block_until_ready(
        multi_path_decoder(x, params, matmul_dtype=jnp.bfloat16))
    err_bf = float(jnp.max(jnp.abs(out_bf - ref)))
    assert jnp.allclose(out_bf, ref, atol=3e-2, rtol=3e-2), err_bf

    print("KERNEL_OK")
</pallas_src>

<mosaic_0001>
module attributes {stable_mosaic.version = 11 : i64} {
  func.func @_mpd_kernel(%arg0: i32, %arg1: i32, %arg2: memref<8x32xf32, #tpu.memory_space<vmem>>, %arg3: memref<32x32xf32, #tpu.memory_space<vmem>>, %arg4: memref<1x32xf32, #tpu.memory_space<vmem>>, %arg5: memref<1x1xf32, #tpu.memory_space<smem>>, %arg6: memref<1x16xf32, #tpu.memory_space<vmem>>, %arg7: memref<1x16xf32, #tpu.memory_space<vmem>>, %arg8: memref<1x16xf32, #tpu.memory_space<vmem>>, %arg9: memref<1x16xf32, #tpu.memory_space<vmem>>, %arg10: memref<16x128xf32, #tpu.memory_space<vmem>>, %arg11: memref<16x128xf32, #tpu.memory_space<vmem>>, %arg12: memref<1x128xf32, #tpu.memory_space<vmem>>, %arg13: memref<8x128xf32, #tpu.memory_space<vmem>>, %arg14: memref<8x32xf32, #tpu.memory_space<vmem>>) attributes {dimension_semantics = [#tpu.dimension_semantics<parallel>, #tpu.dimension_semantics<arbitrary>], iteration_bounds = array<i64: 2, 1>, scalar_prefetch = 0 : i64, scratch_operands = 1 : i64, tpu.core_type = #tpu.core_type<tc>, window_params = [{transform_indices = @transform_0, window_bounds = array<i64: 8, 32>}, {pipeline_mode = #tpu.pipeline_mode<synchronous>, transform_indices = @transform_1, window_bounds = array<i64: 32, 32>}, {pipeline_mode = #tpu.pipeline_mode<synchronous>, transform_indices = @transform_2, window_bounds = array<i64: 1, 32>}, {transform_indices = @transform_3, window_bounds = array<i64: 1, 1>}, {pipeline_mode = #tpu.pipeline_mode<synchronous>, transform_indices = @transform_4, window_bounds = array<i64: 1, 16>}, {pipeline_mode = #tpu.pipeline_mode<synchronous>, transform_indices = @transform_5, window_bounds = array<i64: 1, 16>}, {pipeline_mode = #tpu.pipeline_mode<synchronous>, transform_indices = @transform_6, window_bounds = array<i64: 1, 16>}, {pipeline_mode = #tpu.pipeline_mode<synchronous>, transform_indices = @transform_7, window_bounds = array<i64: 1, 16>}, {pipeline_mode = #tpu.pipeline_mode<synchronous>, transform_indices = @transform_8, window_bounds = array<i64: 16, 128>}, {pipeline_mode = #tpu.pipeline_mode<synchronous>, transform_indices = @transform_9, window_bounds = array<i64: 16, 128>}, {pipeline_mode = #tpu.pipeline_mode<synchronous>, transform_indices = @transform_10, window_bounds = array<i64: 1, 128>}, {transform_indices = @transform_11, window_bounds = array<i64: 8, 128>}]} {
    %c0_i32 = arith.constant 0 : i32
    %0 = arith.cmpi eq, %arg1, %c0_i32 : i32
    %1 = arith.extui %0 : i1 to i32
    %c0_i32_0 = arith.constant 0 : i32
    %2 = arith.cmpi ne, %1, %c0_i32_0 : i32
    scf.if %2 {
      %cst_10 = arith.constant 0.000000e+00 : f32
      %12 = vector.broadcast %cst_10 : f32 to vector<8x32xf32>
      %c0_11 = arith.constant 0 : index
      %c0_12 = arith.constant 0 : index
      %13 = vector.load %arg14[%c0_11, %c0_12] : memref<8x32xf32, #tpu.memory_space<vmem>>, vector<8x32xf32>
      tpu.vector_store %arg14[%c0_11, %c0_12], %12 {strides = array<i32>} : memref<8x32xf32, #tpu.memory_space<vmem>>, vector<8x32xf32>,
    } else {
    }
    %c0 = arith.constant 0 : index
    %c0_1 = arith.constant 0 : index
    %3 = vector.load %arg14[%c0, %c0_1] : memref<8x32xf32, #tpu.memory_space<vmem>>, vector<8x32xf32>
    %c0_2 = arith.constant 0 : index
    %c0_3 = arith.constant 0 : index
    %4 = vector.load %arg2[%c0_2, %c0_3] : memref<8x32xf32, #tpu.memory_space<vmem>>, vector<8x32xf32>
    %c0_4 = arith.constant 0 : index
    %c0_5 = arith.constant 0 : index
    %5 = vector.load %arg3[%c0_4, %c0_5] : memref<32x32xf32, #tpu.memory_space<vmem>>, vector<32x32xf32>
    %cst = arith.constant dense<0.000000e+00> : vector<8x32xf32>
    %6 = tpu.matmul %4, %5, %cst {dimension_numbers = #tpu.dot_dimension_numbers<[1], [0], [0], [1], [0, 0, 1, 1], [], []>} : vector<8x32xf32>, vector<32x32xf32>, vector<8x32xf32> -> vector<8x32xf32>
    %7 = arith.addf %3, %6 : vector<8x32xf32>
    %c0_6 = arith.constant 0 : index
    %c0_7 = arith.constant 0 : index
    %8 = vector.load %arg14[%c0_6, %c0_7] : memref<8x32xf32, #tpu.memory_space<vmem>>, vector<8x32xf32>
    tpu.vector_store %arg14[%c0_6, %c0_7], %7 {strides = array<i32>} : memref<8x32xf32, #tpu.memory_space<vmem>>, vector<8x32xf32>,
    %c0_i32_8 = arith.constant 0 : i32
    %9 = arith.cmpi eq, %arg1, %c0_i32_8 : i32
    %10 = arith.extui %9 : i1 to i32
    %c0_i32_9 = arith.constant 0 : i32
    %11 = arith.cmpi ne, %10, %c0_i32_9 : i32
    scf.if %11 {
      %c0_10 = arith.constant 0 : index
      %c0_11 = arith.constant 0 : index
      %12 = vector.load %arg14[%c0_10, %c0_11] : memref<8x32xf32, #tpu.memory_space<vmem>>, vector<8x32xf32>
      %c0_12 = arith.constant 0 : index
      %c0_13 = arith.constant 0 : index
      %13 = vector.load %arg4[%c0_12, %c0_13] : memref<1x32xf32, #tpu.memory_space<vmem>>, vector<1x32xf32>
      %14 = vector.broadcast %13 : vector<1x32xf32> to vector<8x32xf32>
      %15 = arith.addf %12, %14 : vector<8x32xf32>
      %16 = vector.extract_strided_slice %15 {offsets = [0, 0], sizes = [8, 16], strides = [1, 1]} : vector<8x32xf32> to vector<8x16xf32>
      %c0_14 = arith.constant 0 : index
      %c0_15 = arith.constant 0 : index
      %17 = memref.load %arg5[%c0_14, %c0_15] : memref<1x1xf32, #tpu.memory_space<smem>>
      %cst_16 = arith.constant 0.000000e+00 : f32
      %18 = vector.broadcast %cst_16 : f32 to vector<8x16xf32>
      %19 = arith.cmpf ogt, %16, %18 : vector<8x16xf32>
      %20 = vector.broadcast %17 : f32 to vector<8x16xf32>
      %21 = arith.mulf %20, %16 : vector<8x16xf32>
      %22 = arith.select %19, %16, %21 : vector<8x16xi1>, vector<8x16xf32>
      %c0_17 = arith.constant 0 : index
      %c0_18 = arith.constant 0 : index
      %23 = vector.load %arg6[%c0_17, %c0_18] : memref<1x16xf32, #tpu.memory_space<vmem>>, vector<1x16xf32>
      %c0_19 = arith.constant 0 : index
      %c0_20 = arith.constant 0 : index
      %24 = vector.load %arg7[%c0_19, %c0_20] : memref<1x16xf32, #tpu.memory_space<vmem>>, vector<1x16xf32>
      %cst_21 = arith.constant dense<0.000000e+00> : vector<8xf32>
      %25 = vector.multi_reduction <add>, %22, %cst_21 [1] : vector<8x16xf32> to vector<8xf32>
      %26 = vector.shape_cast %25 : vector<8xf32> to vector<8x1xf32>
      %cst_22 = arith.constant 1.600000e+01 : f32
      %27 = vector.broadcast %cst_22 : f32 to vector<8x1xf32>
      %28 = arith.divf %26, %27 : vector<8x1xf32>
      %29 = vector.broadcast %28 : vector<8x1xf32> to vector<8x16xf32>
      %30 = arith.subf %22, %29 : vector<8x16xf32>
      %31 = arith.mulf %30, %30 : vector<8x16xf32>
      %cst_23 = arith.constant dense<0.000000e+00> : vector<8xf32>
      %32 = vector.multi_reduction <add>, %31, %cst_23 [1] : vector<8x16xf32> to vector<8xf32>
      %33 = vector.shape_cast %32 : vector<8xf32> to vector<8x1xf32>
      %cst_24 = arith.constant 1.600000e+01 : f32
      %34 = vector.broadcast %cst_24 : f32 to vector<8x1xf32>
      %35 = arith.divf %33, %34 : vector<8x1xf32>
      %cst_25 = arith.constant 9.99999974E-6 : f32
      %36 = vector.broadcast %cst_25 : f32 to vector<8x1xf32>
      %37 = arith.addf %35, %36 : vector<8x1xf32>
      %38 = math.rsqrt %37 : vector<8x1xf32>
      %39 = vector.broadcast %38 : vector<8x1xf32> to vector<8x16xf32>
      %40 = arith.mulf %30, %39 : vector<8x16xf32>
      %41 = vector.broadcast %23 : vector<1x16xf32> to vector<8x16xf32>
      %42 = arith.mulf %40, %41 : vector<8x16xf32>
      %43 = vector.broadcast %24 : vector<1x16xf32> to vector<8x16xf32>
      %44 = arith.addf %42, %43 : vector<8x16xf32>
      %45 = vector.extract_strided_slice %15 {offsets = [0, 16], sizes = [8, 16], strides = [1, 1]} : vector<8x32xf32> to vector<8x16xf32>
      %cst_26 = arith.constant 5.000000e-01 : f32
      %46 = vector.broadcast %cst_26 : f32 to vector<8x16xf32>
      %47 = arith.mulf %46, %45 : vector<8x16xf32>
      %cst_27 = arith.constant 0.707106769 : f32
      %48 = vector.broadcast %cst_27 : f32 to vector<8x16xf32>
      %49 = arith.mulf %45, %48 : vector<8x16xf32>
      %50 = math.erf %49 : vector<8x16xf32>
      %cst_28 = arith.constant 1.000000e+00 : f32
      %51 = vector.broadcast %cst_28 : f32 to vector<8x16xf32>
      %52 = arith.addf %51, %50 : vector<8x16xf32>
      %53 = arith.mulf %47, %52 : vector<8x16xf32>
      %c0_29 = arith.constant 0 : index
      %c0_30 = arith.constant 0 : index
      %54 = vector.load %arg8[%c0_29, %c0_30] : memref<1x16xf32, #tpu.memory_space<vmem>>, vector<1x16xf32>
      %c0_31 = arith.constant 0 : index
      %c0_32 = arith.constant 0 : index
      %55 = vector.load %arg9[%c0_31, %c0_32] : memref<1x16xf32, #tpu.memory_space<vmem>>, vector<1x16xf32>
      %cst_33 = arith.constant dense<0.000000e+00> : vector<8xf32>
      %56 = vector.multi_reduction <add>, %53, %cst_33 [1] : vector<8x16xf32> to vector<8xf32>
      %57 = vector.shape_cast %56 : vector<8xf32> to vector<8x1xf32>
      %cst_34 = arith.constant 1.600000e+01 : f32
      %58 = vector.broadcast %cst_34 : f32 to vector<8x1xf32>
      %59 = arith.divf %57, %58 : vector<8x1xf32>
      %60 = vector.broadcast %59 : vector<8x1xf32> to vector<8x16xf32>
      %61 = arith.subf %53, %60 : vector<8x16xf32>
      %62 = arith.mulf %61, %61 : vector<8x16xf32>
      %cst_35 = arith.constant dense<0.000000e+00> : vector<8xf32>
      %63 = vector.multi_reduction <add>, %62, %cst_35 [1] : vector<8x16xf32> to vector<8xf32>
      %64 = vector.shape_cast %63 : vector<8xf32> to vector<8x1xf32>
      %cst_36 = arith.constant 1.600000e+01 : f32
      %65 = vector.broadcast %cst_36 : f32 to vector<8x1xf32>
      %66 = arith.divf %64, %65 : vector<8x1xf32>
      %cst_37 = arith.constant 9.99999974E-6 : f32
      %67 = vector.broadcast %cst_37 : f32 to vector<8x1xf32>
      %68 = arith.addf %66, %67 : vector<8x1xf32>
      %69 = math.rsqrt %68 : vector<8x1xf32>
      %70 = vector.broadcast %69 : vector<8x1xf32> to vector<8x16xf32>
      %71 = arith.mulf %61, %70 : vector<8x16xf32>
      %72 = vector.broadcast %54 : vector<1x16xf32> to vector<8x16xf32>
      %73 = arith.mulf %71, %72 : vector<8x16xf32>
      %74 = vector.broadcast %55 : vector<1x16xf32> to vector<8x16xf32>
      %75 = arith.addf %73, %74 : vector<8x16xf32>
      %c0_38 = arith.constant 0 : index
      %c0_39 = arith.constant 0 : index
      %76 = vector.load %arg10[%c0_38, %c0_39] : memref<16x128xf32, #tpu.memory_space<vmem>>, vector<16x128xf32>
      %cst_40 = arith.constant dense<0.000000e+00> : vector<8x128xf32>
      %77 = tpu.matmul %44, %76, %cst_40 {dimension_numbers = #tpu.dot_dimension_numbers<[1], [0], [0], [1], [0, 0, 1, 1], [], []>} : vector<8x16xf32>, vector<16x128xf32>, vector<8x128xf32> -> vector<8x128xf32>
      %c0_41 = arith.constant 0 : index
      %c0_42 = arith.constant 0 : index
      %78 = vector.load %arg11[%c0_41, %c0_42] : memref<16x128xf32, #tpu.memory_space<vmem>>, vector<16x128xf32>
      %cst_43 = arith.constant dense<0.000000e+00> : vector<8x128xf32>
      %79 = tpu.matmul %75, %78, %cst_43 {dimension_numbers = #tpu.dot_dimension_numbers<[1], [0], [0], [1], [0, 0, 1, 1], [], []>} : vector<8x16xf32>, vector<16x128xf32>, vector<8x128xf32> -> vector<8x128xf32>
      %80 = arith.addf %77, %79 : vector<8x128xf32>
      %c0_44 = arith.constant 0 : index
      %c0_45 = arith.constant 0 : index
      %81 = vector.load %arg12[%c0_44, %c0_45] : memref<1x128xf32, #tpu.memory_space<vmem>>, vector<1x128xf32>
      %82 = vector.broadcast %81 : vector<1x128xf32> to vector<8x128xf32>
      %83 = arith.addf %80, %82 : vector<8x128xf32>
      %c0_46 = arith.constant 0 : index
      %c0_47 = arith.constant 0 : index
      %84 = vector.load %arg13[%c0_46, %c0_47] : memref<8x128xf32, #tpu.memory_space<vmem>>, vector<8x128xf32>
      tpu.vector_store %arg13[%c0_46, %c0_47], %83 {strides = array<i32>} : memref<8x128xf32, #tpu.memory_space<vmem>>, vector<8x128xf32>,
    } else {
    }
    return
  }
  func.func @transform_0(%arg0: i32, %arg1: i32) -> (i32, i32) {
    %c0_i32 = arith.constant 0 : i32
    return %arg0, %arg1 : i32, i32
  }
  func.func @transform_1(%arg0: i32, %arg1: i32) -> (i32, i32) {
    %c0_i32 = arith.constant 0 : i32
    %c0_i32_0 = arith.constant 0 : i32
    return %arg1, %c0_i32 : i32, i32
  }
  func.func @transform_2(%arg0: i32, %arg1: i32) -> (i32, i32) {
    %c0_i32 = arith.constant 0 : i32
    %c0_i32_0 = arith.constant 0 : i32
    %c0_i32_1 = arith.constant 0 : i32
    return %c0_i32, %c0_i32_0 : i32, i32
  }
  func.func @transform_3(%arg0: i32, %arg1: i32) -> (i32, i32) {
    %c0_i32 = arith.constant 0 : i32
    %c0_i32_0 = arith.constant 0 : i32
    %c0_i32_1 = arith.constant 0 : i32
    return %c0_i32, %c0_i32_0 : i32, i32
  }
  func.func @transform_4(%arg0: i32, %arg1: i32) -> (i32, i32) {
    %c0_i32 = arith.constant 0 : i32
    %c0_i32_0 = arith.constant 0 : i32
    %c0_i32_1 = arith.constant 0 : i32
    return %c0_i32, %c0_i32_0 : i32, i32
  }
  func.func @transform_5(%arg0: i32, %arg1: i32) -> (i32, i32) {
    %c0_i32 = arith.constant 0 : i32
    %c0_i32_0 = arith.constant 0 : i32
    %c0_i32_1 = arith.constant 0 : i32
    return %c0_i32, %c0_i32_0 : i32, i32
  }
  func.func @transform_6(%arg0: i32, %arg1: i32) -> (i32, i32) {
    %c0_i32 = arith.constant 0 : i32
    %c0_i32_0 = arith.constant 0 : i32
    %c0_i32_1 = arith.constant 0 : i32
    return %c0_i32, %c0_i32_0 : i32, i32
  }
  func.func @transform_7(%arg0: i32, %arg1: i32) -> (i32, i32) {
    %c0_i32 = arith.constant 0 : i32
    %c0_i32_0 = arith.constant 0 : i32
    %c0_i32_1 = arith.constant 0 : i32
    return %c0_i32, %c0_i32_0 : i32, i32
  }
  func.func @transform_8(%arg0: i32, %arg1: i32) -> (i32, i32) {
    %c0_i32 = arith.constant 0 : i32
    %c0_i32_0 = arith.constant 0 : i32
    %c0_i32_1 = arith.constant 0 : i32
    return %c0_i32, %c0_i32_0 : i32, i32
  }
  func.func @transform_9(%arg0: i32, %arg1: i32) -> (i32, i32) {
    %c0_i32 = arith.constant 0 : i32
    %c0_i32_0 = arith.constant 0 : i32
    %c0_i32_1 = arith.constant 0 : i32
    return %c0_i32, %c0_i32_0 : i32, i32
  }
  func.func @transform_10(%arg0: i32, %arg1: i32) -> (i32, i32) {
    %c0_i32 = arith.constant 0 : i32
    %c0_i32_0 = arith.constant 0 : i32
    %c0_i32_1 = arith.constant 0 : i32
    return %c0_i32, %c0_i32_0 : i32, i32
  }
  func.func @transform_11(%arg0: i32, %arg1: i32) -> (i32, i32) {
    %c0_i32 = arith.constant 0 : i32
    %c0_i32_0 = arith.constant 0 : i32
    return %arg0, %c0_i32 : i32, i32
  }
}

</mosaic_0001>

<llo_original>
// kernel: multi_path_decoder.1
$region0: #{multi_path_decoder.1}
  #allocation0 [shape = 'u32[]', space=smem, size = 0x4, offset = 0x4, fixed_abs, tag = 'smem constant byte address 0x4 - core index']
  #allocation1 [shape = 'u32[144,128]{1,0:T(1,128)}', space=vmem, size = 0x12000, scoped, tag = 'internal scratch']
  #allocation2 [shape = 'f32[8,32]{1,0:T(8,128)}', space=vmem, size = 0x1000, scoped, tag = 'scratch operand']
  #allocation3 [shape = 'f32[1,1]{1,0:T(1,128)S(6)}', space=smem, size = 0x200, scoped, tag = 'scoped memory for multi_path_decoder.1']
  %s0 = inlined_call_operand.vmem [shape: f32[16,32], index: 0, kind: input, shape index: {}]
  %s1 = inlined_call_operand.vmem [shape: f32[32,32], index: 1, kind: input, shape index: {}]
  %s2 = inlined_call_operand.vmem [shape: f32[1,32], index: 2, kind: input, shape index: {}]
  %s3 = inlined_call_operand.<no memory space> [shape: f32[1,1], index: 3, kind: input, shape index: {}]
  %s4 = inlined_call_operand.vmem [shape: f32[1,16], index: 4, kind: input, shape index: {}]
  %s5 = inlined_call_operand.vmem [shape: f32[1,16], index: 5, kind: input, shape index: {}]
  %s6 = inlined_call_operand.vmem [shape: f32[1,16], index: 6, kind: input, shape index: {}]
  %s7 = inlined_call_operand.vmem [shape: f32[1,16], index: 7, kind: input, shape index: {}]
  %s8 = inlined_call_operand.vmem [shape: f32[16,128], index: 8, kind: input, shape index: {}]
  %s9 = inlined_call_operand.vmem [shape: f32[16,128], index: 9, kind: input, shape index: {}]
  %s10 = inlined_call_operand.vmem [shape: f32[1,128], index: 10, kind: input, shape index: {}]
  %s11 = inlined_call_operand.vmem [shape: f32[16,128], index: 11, kind: output, shape index: {}]
  %s12 = sld [smem:[#allocation0]]
  $region85: #{multi_path_decoder.1} parent=0
    _
  %s14 = ssub.s32 1, %s12
  %s15 = scalar_select 0, %s14, %s12
  %16 = sst [smem:[#allocation3]] %s3
  loop: start=0, step=1, limit=4
  $region2: #{multi_path_decoder.1} parent=0 // loop_pre_header
    _
  $region3: #{multi_path_decoder.1} parent=0 // loop_header
    %s18 = sphi 0, %s22
    %p19 = scmp.ge.s32.totalorder %s18, 4
    %s25 = sphi 0, %s37
    %s26 = sphi 0, %s33
    %s27 = sphi 0, %s25
    %s28 = sphi 0, %s26
    %s29 = sphi 0, %s27
    %s30 = sphi 0, %s28
    %s42 = sphi 0, %s44
    %s45 = sphi 0, %s42
    %s46 = sphi 0, %s45
    %s62 = sphi 0, %s46
    %s68 = sphi 0, %s70
    %s71 = sphi 0, %s68
    %s72 = sphi 0, %s71
    %s88 = sphi 0, %s72
    %s92 = sphi 0, %s92
    %s94 = sphi 0, %s92
    %s95 = sphi 0, %s94
    %s109 = sphi 0, %s95
    %s113 = sphi 0, %s113
    %s115 = sphi 0, %s113
    %s116 = sphi 0, %s115
    %s130 = sphi 0, %s116
    %s134 = sphi 0, %s134
    %s136 = sphi 0, %s134
    %s137 = sphi 0, %s136
    %s151 = sphi 0, %s137
    %s155 = sphi 0, %s155
    %s157 = sphi 0, %s155
    %s158 = sphi 0, %s157
    %s172 = sphi 0, %s158
    %s176 = sphi 0, %s176
    %s178 = sphi 0, %s176
    %s179 = sphi 0, %s178
    %s193 = sphi 0, %s179
    %s197 = sphi 0, %s197
    %s199 = sphi 0, %s197
    %s200 = sphi 0, %s199
    %s214 = sphi 0, %s200
    %s218 = sphi 0, %s218
    %s220 = sphi 0, %s218
    %s221 = sphi 0, %s220
    %s235 = sphi 0, %s221
    %s239 = sphi 0, %s239
    %s241 = sphi 0, %s239
    %s242 = sphi 0, %s241
    %s256 = sphi 0, %s242
    %s260 = sphi 0, %s260
    %s262 = sphi 0, %s260
    %s263 = sphi 0, %s262
    %s277 = sphi 0, %s263
    %s283 = sphi 0, %s285
    %s286 = sphi 0, %s283
    %s287 = sphi 0, %s286
    %s303 = sphi 0, %s287
  $region4: #{multi_path_decoder.1} parent=0 // loop_header_branch
    %21 = sbr.rel (%p19) target = $region8
  $region5: #{multi_path_decoder.1} parent=0 // loop_body
    %s23 = ssub.s32 %s18, 1
    %s24 = ssub.s32 %s18, 2
    %s31 = sadd.s32 1, %s26
    %p32 = scmp.ge.s32.totalorder %s31, 1
    %s33 = scalar_select %p32, 0, %s31
    %s34 = sadd.s32 1, %s25
    %s35 = scalar_select %p32, %s34, %s25
    %p36 = scmp.ge.s32.totalorder %s35, 2
    %s37 = scalar_select %p36, 0, %s35
    %s38 = ssub.s32 %s25, %s37
    %s39 = ssub.s32 %s26, %s33
    %s40 = sor.u32 %s38, %s39
    %p41 = scmp.eq.s32.totalorder %s40, 0
    %s43 = sadd.s32 %s42, 1
    %s44 = scalar_select %p41, %s42, %s43
    %p47 = pneg %p41
    %p48 = scmp.eq.s32.totalorder %s18, 1
    %p49 = por %p47, %p48
    %p50 = scmp.ne.s32.totalorder %s42, %s45
    %p51 = scmp.eq.s32.totalorder %s18, 0
    %p52 = por %p50, %p51
    %p53 = scmp.ne.s32.totalorder %s42, %s45
    %p54 = scmp.eq.s32.totalorder %s23, 1
    %p55 = por %p53, %p54
    %p56 = scmp.ne.s32.totalorder %s45, %s46
    %p57 = scmp.eq.s32.totalorder %s23, 0
    %p58 = por %p56, %p57
    %p59 = scmp.ne.s32.totalorder %s45, %s46
    %p60 = scmp.eq.s32.totalorder %s24, 1
    %p61 = por %p59, %p60
    %p63 = scmp.ne.s32.totalorder %s46, %s62
    %p64 = scmp.eq.s32.totalorder %s24, 0
    %p65 = por %p63, %p64
    %s66 = ssub.s32 %s26, %s33
    %p67 = scmp.eq.s32.totalorder %s66, 0
    %s69 = sadd.s32 %s68, 1
    %s70 = scalar_select %p67, %s68, %s69
    %p73 = pneg %p67
    %p74 = scmp.eq.s32.totalorder %s18, 1
    %p75 = por %p73, %p74
    %p76 = scmp.ne.s32.totalorder %s68, %s71
    %p77 = scmp.eq.s32.totalorder %s18, 0
    %p78 = por %p76, %p77
    %p79 = scmp.ne.s32.totalorder %s68, %s71
    %p80 = scmp.eq.s32.totalorder %s23, 1
    %p81 = por %p79, %p80
    %p82 = scmp.ne.s32.totalorder %s71, %s72
    %p83 = scmp.eq.s32.totalorder %s23, 0
    %p84 = por %p82, %p83
    %p85 = scmp.ne.s32.totalorder %s71, %s72
    %p86 = scmp.eq.s32.totalorder %s24, 1
    %p87 = por %p85, %p86
    %p89 = scmp.ne.s32.totalorder %s72, %s88
    %p90 = scmp.eq.s32.totalorder %s24, 0
    %p91 = por %p89, %p90
    %s93 = sadd.s32 %s92, 1
    %p96 = scmp.eq.s32.totalorder %s18, 1
    %p97 = scmp.ne.s32.totalorder %s92, %s94
    %p98 = scmp.eq.s32.totalorder %s18, 0
    %p99 = por %p97, %p98
    %p100 = scmp.ne.s32.totalorder %s92, %s94
    %p101 = scmp.eq.s32.totalorder %s23, 1
    %p102 = por %p100, %p101
    %p103 = scmp.ne.s32.totalorder %s94, %s95
    %p104 = scmp.eq.s32.totalorder %s23, 0
    %p105 = por %p103, %p104
    %p106 = scmp.ne.s32.totalorder %s94, %s95
    %p107 = scmp.eq.s32.totalorder %s24, 1
    %p108 = por %p106, %p107
    %p110 = scmp.ne.s32.totalorder %s95, %s109
    %p111 = scmp.eq.s32.totalorder %s24, 0
    %p112 = por %p110, %p111
    %s114 = sadd.s32 %s113, 1
    %p117 = scmp.eq.s32.totalorder %s18, 1
    %p118 = scmp.ne.s32.totalorder %s113, %s115
    %p119 = scmp.eq.s32.totalorder %s18, 0
    %p120 = por %p118, %p119
    %p121 = scmp.ne.s32.totalorder %s113, %s115
    %p122 = scmp.eq.s32.totalorder %s23, 1
    %p123 = por %p121, %p122
    %p124 = scmp.ne.s32.totalorder %s115, %s116
    %p125 = scmp.eq.s32.totalorder %s23, 0
    %p126 = por %p124, %p125
    %p127 = scmp.ne.s32.totalorder %s115, %s116
    %p128 = scmp.eq.s32.totalorder %s24, 1
    %p129 = por %p127, %p128
    %p131 = scmp.ne.s32.totalorder %s116, %s130
    %p132 = scmp.eq.s32.totalorder %s24, 0
    %p133 = por %p131, %p132
    %s135 = sadd.s32 %s134, 1
    %p138 = scmp.eq.s32.totalorder %s18, 1
    %p139 = scmp.ne.s32.totalorder %s134, %s136
    %p140 = scmp.eq.s32.totalorder %s18, 0
    %p141 = por %p139, %p140
    %p142 = scmp.ne.s32.totalorder %s134, %s136
    %p143 = scmp.eq.s32.totalorder %s23, 1
    %p144 = por %p142, %p143
    %p145 = scmp.ne.s32.totalorder %s136, %s137
    %p146 = scmp.eq.s32.totalorder %s23, 0
    %p147 = por %p145, %p146
    %p148 = scmp.ne.s32.totalorder %s136, %s137
    %p149 = scmp.eq.s32.totalorder %s24, 1
    %p150 = por %p148, %p149
    %p152 = scmp.ne.s32.totalorder %s137, %s151
    %p153 = scmp.eq.s32.totalorder %s24, 0
    %p154 = por %p152, %p153
    %s156 = sadd.s32 %s155, 1
    %p159 = scmp.eq.s32.totalorder %s18, 1
    %p160 = scmp.ne.s32.totalorder %s155, %s157
    %p161 = scmp.eq.s32.totalorder %s18, 0
    %p162 = por %p160, %p161
    %p163 = scmp.ne.s32.totalorder %s155, %s157
    %p164 = scmp.eq.s32.totalorder %s23, 1
    %p165 = por %p163, %p164
    %p166 = scmp.ne.s32.totalorder %s157, %s158
    %p167 = scmp.eq.s32.totalorder %s23, 0
    %p168 = por %p166, %p167
    %p169 = scmp.ne.s32.totalorder %s157, %s158
    %p170 = scmp.eq.s32.totalorder %s24, 1
    %p171 = por %p169, %p170
    %p173 = scmp.ne.s32.totalorder %s158, %s172
    %p174 = scmp.eq.s32.totalorder %s24, 0
    %p175 = por %p173, %p174
    %s177 = sadd.s32 %s176, 1
    %p180 = scmp.eq.s32.totalorder %s18, 1
    %p181 = scmp.ne.s32.totalorder %s176, %s178
    %p182 = scmp.eq.s32.totalorder %s18, 0
    %p183 = por %p181, %p182
    %p184 = scmp.ne.s32.totalorder %s176, %s178
    %p185 = scmp.eq.s32.totalorder %s23, 1
    %p186 = por %p184, %p185
    %p187 = scmp.ne.s32.totalorder %s178, %s179
    %p188 = scmp.eq.s32.totalorder %s23, 0
    %p189 = por %p187, %p188
    %p190 = scmp.ne.s32.totalorder %s178, %s179
    %p191 = scmp.eq.s32.totalorder %s24, 1
    %p192 = por %p190, %p191
    %p194 = scmp.ne.s32.totalorder %s179, %s193
    %p195 = scmp.eq.s32.totalorder %s24, 0
    %p196 = por %p194, %p195
    %s198 = sadd.s32 %s197, 1
    %p201 = scmp.eq.s32.totalorder %s18, 1
    %p202 = scmp.ne.s32.totalorder %s197, %s199
    %p203 = scmp.eq.s32.totalorder %s18, 0
    %p204 = por %p202, %p203
    %p205 = scmp.ne.s32.totalorder %s197, %s199
    %p206 = scmp.eq.s32.totalorder %s23, 1
    %p207 = por %p205, %p206
    %p208 = scmp.ne.s32.totalorder %s199, %s200
    %p209 = scmp.eq.s32.totalorder %s23, 0
    %p210 = por %p208, %p209
    %p211 = scmp.ne.s32.totalorder %s199, %s200
    %p212 = scmp.eq.s32.totalorder %s24, 1
    %p213 = por %p211, %p212
    %p215 = scmp.ne.s32.totalorder %s200, %s214
    %p216 = scmp.eq.s32.totalorder %s24, 0
    %p217 = por %p215, %p216
    %s219 = sadd.s32 %s218, 1
    %p222 = scmp.eq.s32.totalorder %s18, 1
    %p223 = scmp.ne.s32.totalorder %s218, %s220
    %p224 = scmp.eq.s32.totalorder %s18, 0
    %p225 = por %p223, %p224
    %p226 = scmp.ne.s32.totalorder %s218, %s220
    %p227 = scmp.eq.s32.totalorder %s23, 1
    %p228 = por %p226, %p227
    %p229 = scmp.ne.s32.totalorder %s220, %s221
    %p230 = scmp.eq.s32.totalorder %s23, 0
    %p231 = por %p229, %p230
    %p232 = scmp.ne.s32.totalorder %s220, %s221
    %p233 = scmp.eq.s32.totalorder %s24, 1
    %p234 = por %p232, %p233
    %p236 = scmp.ne.s32.totalorder %s221, %s235
    %p237 = scmp.eq.s32.totalorder %s24, 0
    %p238 = por %p236, %p237
    %s240 = sadd.s32 %s239, 1
    %p243 = scmp.eq.s32.totalorder %s18, 1
    %p244 = scmp.ne.s32.totalorder %s239, %s241
    %p245 = scmp.eq.s32.totalorder %s18, 0
    %p246 = por %p244, %p245
    %p247 = scmp.ne.s32.totalorder %s239, %s241
    %p248 = scmp.eq.s32.totalorder %s23, 1
    %p249 = por %p247, %p248
    %p250 = scmp.ne.s32.totalorder %s241, %s242
    %p251 = scmp.eq.s32.totalorder %s23, 0
    %p252 = por %p250, %p251
    %p253 = scmp.ne.s32.totalorder %s241, %s242
    %p254 = scmp.eq.s32.totalorder %s24, 1
    %p255 = por %p253, %p254
    %p257 = scmp.ne.s32.totalorder %s242, %s256
    %p258 = scmp.eq.s32.totalorder %s24, 0
    %p259 = por %p257, %p258
    %s261 = sadd.s32 %s260, 1
    %p264 = scmp.eq.s32.totalorder %s18, 1
    %p265 = scmp.ne.s32.totalorder %s260, %s262
    %p266 = scmp.eq.s32.totalorder %s18, 0
    %p267 = por %p265, %p266
    %p268 = scmp.ne.s32.totalorder %s260, %s262
    %p269 = scmp.eq.s32.totalorder %s23, 1
    %p270 = por %p268, %p269
    %p271 = scmp.ne.s32.totalorder %s262, %s263
    %p272 = scmp.eq.s32.totalorder %s23, 0
    %p273 = por %p271, %p272
    %p274 = scmp.ne.s32.totalorder %s262, %s263
    %p275 = scmp.eq.s32.totalorder %s24, 1
    %p276 = por %p274, %p275
    %p278 = scmp.ne.s32.totalorder %s263, %s277
    %p279 = scmp.eq.s32.totalorder %s24, 0
    %p280 = por %p278, %p279
    %s281 = ssub.s32 %s25, %s37
    %p282 = scmp.eq.s32.totalorder %s281, 0
    %s284 = sadd.s32 %s283, 1
    %s285 = scalar_select %p282, %s283, %s284
    %p288 = pneg %p282
    %p289 = scmp.eq.s32.totalorder %s18, 1
    %p290 = por %p288, %p289
    %p291 = scmp.ne.s32.totalorder %s283, %s286
    %p292 = scmp.eq.s32.totalorder %s18, 0
    %p293 = por %p291, %p292
    %p294 = scmp.ne.s32.totalorder %s283, %s286
    %p295 = scmp.eq.s32.totalorder %s23, 1
    %p296 = por %p294, %p295
    %p297 = scmp.ne.s32.totalorder %s286, %s287
    %p298 = scmp.eq.s32.totalorder %s23, 0
    %p299 = por %p297, %p298
    %p300 = scmp.ne.s32.totalorder %s286, %s287
    %p301 = scmp.eq.s32.totalorder %s24, 1
    %p302 = por %p300, %p301
    %p304 = scmp.ne.s32.totalorder %s287, %s303
    %p305 = scmp.eq.s32.totalorder %s24, 0
    %p306 = por %p304, %p305
    %p307 = scmp.le.s32.totalorder 1, %s18
    %p308 = scmp.lt.s32.totalorder %s18, 3
    %p309 = pnand %p307, %p308
    %p310 = pneg %p309
    // Predicated region
    $region9: #{multi_path_decoder.1} parent=5 // pred_check
      _
    $region10: #{multi_path_decoder.1} parent=5 // pred_check_branch
      %312 = sbr.rel (%p309) target = $region12
    $region11: #{multi_path_decoder.1} parent=5 // pred_region
      %s313 = ssub.s32 %s18, 1
      // Predicated region
      $region13: #{multi_path_decoder.1} parent=11 // pred_check
        %p314 = pneg %p84
      $region14: #{multi_path_decoder.1} parent=11 // pred_check_branch
        %316 = sbr.rel (%p314) target = $region16
      $region15: #{multi_path_decoder.1} parent=11 // pred_region
        %s317 = smul.u32 4, %s28
        %p318 = scmp.lt.s32.totalorder %s317, 3
        %s319 = scalar_select %p318, %s317, 3
        %s320 = smul.addr %s319, 8
        %s321 = scalar_lea.vmem %s1, %s320
        %s322 = smul.u32 4, %s28
      $region16: #{multi_path_decoder.1} parent=11 // pred_fallthru
        _
      // Predicated region
      $region17: #{multi_path_decoder.1} parent=11 // pred_check
        %p323 = pneg %p105
      $region18: #{multi_path_decoder.1} parent=11 // pred_check_branch
        %325 = sbr.rel (%p323) target = $region20
      $region19: #{multi_path_decoder.1} parent=11 // pred_region
        _
      $region20: #{multi_path_decoder.1} parent=11 // pred_fallthru
        _
      // Predicated region
      $region21: #{multi_path_decoder.1} parent=11 // pred_check
        %p326 = pneg %p126
      $region22: #{multi_path_decoder.1} parent=11 // pred_check_branch
        %328 = sbr.rel (%p326) target = $region24
      $region23: #{multi_path_decoder.1} parent=11 // pred_region
        _
      $region24: #{multi_path_decoder.1} parent=11 // pred_fallthru
        _
      // Predicated region
      $region25: #{multi_path_decoder.1} parent=11 // pred_check
        %p329 = pneg %p147
      $region26: #{multi_path_decoder.1} parent=11 // pred_check_branch
        %331 = sbr.rel (%p329) target = $region28
      $region27: #{multi_path_decoder.1} parent=11 // pred_region
        _
      $region28: #{multi_path_decoder.1} parent=11 // pred_fallthru
        _
      // Predicated region
      $region29: #{multi_path_decoder.1} parent=11 // pred_check
        %p332 = pneg %p168
      $region30: #{multi_path_decoder.1} parent=11 // pred_check_branch
        %334 = sbr.rel (%p332) target = $region32
      $region31: #{multi_path_decoder.1} parent=11 // pred_region
        _
      $region32: #{multi_path_decoder.1} parent=11 // pred_fallthru
        _
      // Predicated region
      $region33: #{multi_path_decoder.1} parent=11 // pred_check
        %p335 = pneg %p189
      $region34: #{multi_path_decoder.1} parent=11 // pred_check_branch
        %337 = sbr.rel (%p335) target = $region36
      $region35: #{multi_path_decoder.1} parent=11 // pred_region
        _
      $region36: #{multi_path_decoder.1} parent=11 // pred_fallthru
        _
      // Predicated region
      $region37: #{multi_path_decoder.1} parent=11 // pred_check
        %p338 = pneg %p210
      $region38: #{multi_path_decoder.1} parent=11 // pred_check_branch
        %340 = sbr.rel (%p338) target = $region40
      $region39: #{multi_path_decoder.1} parent=11 // pred_region
        _
      $region40: #{multi_path_decoder.1} parent=11 // pred_fallthru
        _
      // Predicated region
      $region41: #{multi_path_decoder.1} parent=11 // pred_check
        %p341 = pneg %p231
      $region42: #{multi_path_decoder.1} parent=11 // pred_check_branch
        %343 = sbr.rel (%p341) target = $region44
      $region43: #{multi_path_decoder.1} parent=11 // pred_region
        _
      $region44: #{multi_path_decoder.1} parent=11 // pred_fallthru
        _
      // Predicated region
      $region45: #{multi_path_decoder.1} parent=11 // pred_check
        %p344 = pneg %p252
      $region46: #{multi_path_decoder.1} parent=11 // pred_check_branch
        %346 = sbr.rel (%p344) target = $region48
      $region47: #{multi_path_decoder.1} parent=11 // pred_region
        _
      $region48: #{multi_path_decoder.1} parent=11 // pred_fallthru
        _
      // Predicated region
      $region49: #{multi_path_decoder.1} parent=11 // pred_check
        %p347 = pneg %p273
      $region50: #{multi_path_decoder.1} parent=11 // pred_check_branch
        %349 = sbr.rel (%p347) target = $region52
      $region51: #{multi_path_decoder.1} parent=11 // pred_region
        _
      $region52: #{multi_path_decoder.1} parent=11 // pred_fallthru
        _
    $region12: #{multi_path_decoder.1} parent=5 // pred_fallthru
      _
    %p350 = scmp.lt.s32.totalorder %s18, 2
    // Predicated region
    $region53: #{multi_path_decoder.1} parent=5 // pred_check
      %p351 = pneg %p350
    $region54: #{multi_path_decoder.1} parent=5 // pred_check_branch
      %353 = sbr.rel (%p351) target = $region56
    $region55: #{multi_path_decoder.1} parent=5 // pred_region
      // Predicated region
      $region57: #{multi_path_decoder.1} parent=55 // pred_check
        %p354 = pneg %p52
      $region58: #{multi_path_decoder.1} parent=55 // pred_check_branch
        %356 = sbr.rel (%p354) target = $region60
      $region59: #{multi_path_decoder.1} parent=55 // pred_region
        %p357 = scmp.lt.s32.totalorder %s25, 1
        %s358 = scalar_select %p357, %s25, 1
        %p359 = scmp.lt.s32.totalorder %s26, 0
        %s360 = scalar_select %p359, %s26, 0
        %s361 = sadd.s32 %s360, %s358
        %s362 = smul.addr %s361, 8
        %s363 = scalar_lea.vmem %s0, %s362
      $region60: #{multi_path_decoder.1} parent=55 // pred_fallthru
        _
    $region56: #{multi_path_decoder.1} parent=5 // pred_fallthru
      _
    %p364 = scmp.le.s32.totalorder 1, %s18
    %p365 = scmp.lt.s32.totalorder %s18, 3
    %p366 = pnand %p364, %p365
    %p367 = pneg %p366
    // Predicated region
    $region61: #{multi_path_decoder.1} parent=5 // pred_check
      _
    $region62: #{multi_path_decoder.1} parent=5 // pred_check_branch
      %369 = sbr.rel (%p366) target = $region64
    $region63: #{multi_path_decoder.1} parent=5 // pred_region
      %s370 = ssub.s32 %s18, 1
      %p371 = scmp.lt.s32.totalorder %s27, 1
      %s372 = scalar_select %p371, %s27, 1
      %p373 = scmp.lt.s32.totalorder %s28, 0
      %s374 = scalar_select %p373, %s28, 0
      %s375 = sadd.s32 %s374, %s372
      %s376 = smul.addr %s375, 8
      %s377 = scalar_lea.vmem %s0, %s376
      %p378 = pneg %p58
      %p379 = pneg %p55
      %s380 = smul.u32 4, %s28
      %p381 = scmp.lt.s32.totalorder %s380, 3
      %s382 = scalar_select %p381, %s380, 3
      %s383 = smul.addr %s382, 8
      %s384 = scalar_lea.vmem %s1, %s383
      %p385 = pneg %p84
      %p386 = pneg %p81
      %p387 = pneg %p105
      %p388 = pneg %p102
      %p389 = pneg %p126
      %p390 = pneg %p123
      %p391 = pneg %p147
      %p392 = pneg %p144
      %p393 = pneg %p168
      %p394 = pneg %p165
      %p395 = pneg %p189
      %p396 = pneg %p186
      %p397 = pneg %p210
      %p398 = pneg %p207
      %p399 = pneg %p231
      %p400 = pneg %p228
      %p401 = pneg %p252
      %p402 = pneg %p249
      %p403 = pneg %p273
      %p404 = pneg %p270
      %p405 = pneg %p299
      %p406 = pneg %p296
      %p407 = scmp.lt.s32.totalorder %s27, 1
      %s408 = scalar_select %p407, %s27, 1
      %s409 = smul.addr %s408, 8
      %s410 = scalar_lea.vmem %s11, %s409
      %p411 = scmp.lt.s32.totalorder %s27, 1
      %s412 = scalar_select %p411, %s27, 1
      %p413 = scmp.lt.s32.totalorder %s28, 0
      %s414 = scalar_select %p413, %s28, 0
      %s415 = sadd.s32 %s414, %s412
      %s416 = smul.addr %s415, 8
      %s417 = scalar_lea.vmem %s0, %s416
      %s418 = smul.u32 4, %s28
      %p419 = scmp.lt.s32.totalorder %s418, 3
      %s420 = scalar_select %p419, %s418, 3
      %s421 = smul.addr %s420, 8
      %s422 = scalar_lea.vmem %s1, %s421
      %s423 = smul.u32 4, %s28
      %p424 = scmp.lt.s32.totalorder %s27, 1
      %s425 = scalar_select %p424, %s27, 1
      %s426 = smul.addr %s425, 8
      %s427 = scalar_lea.vmem %s11, %s426
      %p428 = scmp.eq.s32.totalorder %s28, 0
      // Predicated region
      $region65: #{multi_path_decoder.1} parent=63 // pred_check
        %p429 = pneg %p428
      $region66: #{multi_path_decoder.1} parent=63 // pred_check_branch
        %431 = sbr.rel (%p429) target = $region68
      $region67: #{multi_path_decoder.1} parent=63 // pred_region
        %vm432 = vcmask 261120
        %433 = vst.msk [vmem:[#allocation2] sm:$0xff] %vm432, 0.0
      $region68: #{multi_path_decoder.1} parent=63 // pred_fallthru
        _
      %v434 = vld [vmem:[#allocation2] sm:$0xff]
      %v435 = vld [vmem:[%s417] sm:$0xff]
      %v436 = vld [vmem:[%s422] sm:$0xff]
      %v437 = vld [vmem:[%s422 + $0x8] sm:$0xff]
      %v438 = vld [vmem:[%s422 + $0x10] sm:$0xff]
      %v439 = vld [vmem:[%s422 + $0x18] sm:$0xff]
      %vm440 = vcmask 261120
      %v442 = vsel %vm440, %v435, 0
      %444 = vmatprep.subr.mxu0 0.0
      %445 = vmatpush1.msra.mxu0 0.0
      %446 = vmatprep.subr.mxu0 0.0
      %447 = vmatpush1.msra.mxu0 0.0
      %448 = vmatprep.subr.mxu0 0.0
      %449 = vmatpush1.msra.mxu0 0.0
      %450 = vmatprep.subr.mxu0 0.0
      %451 = vmatpush1.msra.mxu0 0.0
      %452 = vmatprep.subr.mxu0 0.0
      %453 = vmatpush1.msra.mxu0 0.0
      %454 = vmatprep.subr.mxu0 0.0
      %455 = vmatpush1.msra.mxu0 0.0
      %456 = vmatprep.subr.mxu0 0.0
      %457 = vmatpush1.msra.mxu0 0.0
      %458 = vmatprep.subr.mxu0 0.0
      %459 = vmatpush1.msra.mxu0 0.0
      %460 = vmatprep.subr.mxu0 0.0
      %461 = vmatpush1.msra.mxu0 0.0
      %462 = vmatprep.subr.mxu0 0.0
      %463 = vmatpush1.msra.mxu0 0.0
      %464 = vmatprep.subr.mxu0 0.0
      %465 = vmatpush1.msra.mxu0 0.0
      %466 = vmatprep.subr.mxu0 0.0
      %467 = vmatpush1.msra.mxu0 0.0
      %468 = vmatprep.subr.mxu0 0.0
      %469 = vmatpush1.msra.mxu0 %v439
      %470 = vmatprep.subr.mxu0 0.0
      %471 = vmatpush1.msra.mxu0 %v438
      %472 = vmatprep.subr.mxu0 0.0
      %473 = vmatpush1.msra.mxu0 %v437
      %474 = vmatprep.subr.mxu0 0.0
      %475 = vmatpush1.msra.mxu0 %v436
      %476 = vmatprep.subr.mxu0 0.0
      %477 = vmatpush2.msra.mxu0 0.0
      %478 = vmatprep.subr.mxu0 0.0
      %479 = vmatpush2.msra.mxu0 0.0
      %480 = vmatprep.subr.mxu0 0.0
      %481 = vmatpush2.msra.mxu0 0.0
      %482 = vmatprep.subr.mxu0 0.0
      %483 = vmatpush2.msra.mxu0 0.0
      %484 = vmatprep.subr.mxu0 0.0
      %485 = vmatpush2.msra.mxu0 0.0
      %486 = vmatprep.subr.mxu0 0.0
      %487 = vmatpush2.msra.mxu0 0.0
      %488 = vmatprep.subr.mxu0 0.0
      %489 = vmatpush2.msra.mxu0 0.0
      %490 = vmatprep.subr.mxu0 0.0
      %491 = vmatpush2.msra.mxu0 0.0
      %492 = vmatprep.subr.mxu0 0.0
      %493 = vmatpush2.msra.mxu0 0.0
      %494 = vmatprep.subr.mxu0 0.0
      %495 = vmatpush2.msra.mxu0 0.0
      %496 = vmatprep.subr.mxu0 0.0
      %497 = vmatpush2.msra.mxu0 0.0
      %498 = vmatprep.subr.mxu0 0.0
      %499 = vmatpush2.msra.mxu0 0.0
      %500 = vmatprep.subr.mxu0 0.0
      %501 = vmatpush2.msra.mxu0 0.0
      %502 = vmatprep.subr.mxu0 0.0
      %503 = vmatpush2.msra.mxu0 0.0
      %504 = vmatprep.subr.mxu0 0.0
      %505 = vmatpush2.msra.mxu0 0.0
      %506 = vmatprep.subr.mxu0 0.0
      %507 = vmatpush2.msra.mxu0 0.0
      %508 = vmatprep.mubr.f32.mxu0 0.0
      %509 = vmatmul.mubr.f32.gmra.mxu0 %v442
      %v510 = vpop.f32.mrf.mxu0
      %v511 = vadd.f32 0.0, %v510
      %v512 = vpop.f32.mrf.mxu0
      %513 = vdwg.mxu0
      %v514 = vadd.f32 %v434, %v511
      %515 = vst.msk [vmem:[#allocation2] sm:$0xff] %vm440, %v514
      // Predicated region
      $region69: #{multi_path_decoder.1} parent=63 // pred_check
        %p516 = pneg %p428
      $region70: #{multi_path_decoder.1} parent=63 // pred_check_branch
        %518 = sbr.rel (%p516) target = $region72
      $region71: #{multi_path_decoder.1} parent=63 // pred_region
        %v519 = vld [vmem:[#allocation2] sm:$0xff]
        %v520 = vld [vmem:[%s2] sm:$0x1]
        %v522 = vlaneseq
        %v523 = vshrl.u32 %v522, 7
        %v524 = vsub.s32 0, %v523
        %v525 = vrot.slane %v520, %v524
        %v527 = vadd.f32 %v519, %v525
        %s528 = sld [smem:[#allocation3]]
        %vm529 = vcmp.gt.f32.partialorder %v527, 0.0
        %v530 = vstv %s528
        %v531 = vmul.f32 %v530, %v527
        %v532 = vsel %vm529, %v527, %v531
        %v533 = vld [vmem:[%s4] sm:$0x1]
        %v534 = vld [vmem:[%s5] sm:$0x1]
        %vm535 = vcmask 130048
        %v536 = vsel %vm535, %v532, 0.0
        %537 = vadd.xlane.f32.xlu0 %v536
        %v538 = vpop.xlane.xlu0 %537
        %v539 = vrcp.pop 16.0
        %v540 = vmul.f32 %v538, %v539
        %v541 = vsub.f32 %v532, %v540
        %v542 = vmul.f32 %v541, %v541
        %v543 = vsel %vm535, %v542, 0.0
        %544 = vadd.xlane.f32.xlu0 %v543
        %v545 = vpop.xlane.xlu0 %544
        %v546 = vmul.f32 %v545, %v539
        %v547 = vadd.f32 %v546, 1e-05
        %v548 = vrsqrt.pop %v547
        %v549 = vmul.f32 %v541, %v548
        %v551 = vlaneseq
        %v552 = vshrl.u32 %v551, 7
        %v553 = vsub.s32 0, %v552
        %v554 = vrot.slane %v533, %v553
        %v556 = vmul.f32 %v549, %v554
        %v558 = vlaneseq
        %v559 = vshrl.u32 %v558, 7
        %v560 = vsub.s32 0, %v559
        %v561 = vrot.slane %v534, %v560
        %v563 = vadd.f32 %v556, %v561
        %v564 = vmul.f32 %v527, 0.5
        %v565 = vmul.f32 %v527, 0.70710677
        %v566 = verf.f32.pop %v565
        %v567 = vadd.f32 %v566, 1.0
        %v568 = vmul.f32 %v564, %v567
        %v569 = vld [vmem:[%s6] sm:$0x1]
        %v570 = vld [vmem:[%s7] sm:$0x1]
        %572 = vrot.lane.b32.xlu0 %v568, 112
        %v573 = vpop.permute.xlu0 %572
        %v575 = vsel %vm535, %v573, 0.0
        %576 = vadd.xlane.f32.xlu0 %v575
        %v577 = vpop.xlane.xlu0 %576
        %v578 = vmul.f32 %v577, %v539
        %v579 = vsub.f32 %v568, %v578
        %v580 = vmul.f32 %v579, %v579
        %582 = vrot.lane.b32.xlu0 %v580, 112
        %v583 = vpop.permute.xlu0 %582
        %v585 = vsel %vm535, %v583, 0.0
        %586 = vadd.xlane.f32.xlu0 %v585
        %v587 = vpop.xlane.xlu0 %586
        %v588 = vmul.f32 %v587, %v539
        %v589 = vadd.f32 %v588, 1e-05
        %v590 = vrsqrt.pop %v589
        %v591 = vmul.f32 %v579, %v590
        %v593 = vlaneseq
        %v594 = vshrl.u32 %v593, 7
        %v595 = vsub.s32 0, %v594
        %v596 = vrot.slane %v569, %v595
        %597 = vrot.lane.b32.xlu0 %v596, 16
        %v598 = vpop.permute.xlu0 %597
        %v600 = vmul.f32 %v591, %v598
        %v602 = vlaneseq
        %v603 = vshrl.u32 %v602, 7
        %v604 = vsub.s32 0, %v603
        %v605 = vrot.slane %v570, %v604
        %606 = vrot.lane.b32.xlu0 %v605, 16
        %v607 = vpop.permute.xlu0 %606
        %v609 = vadd.f32 %v600, %v607
        %v610 = vld [vmem:[%s8] sm:$0xff]
        %v611 = vld [vmem:[%s8 + $0x8] sm:$0xff]
        %v612 = vld [vmem:[%s9] sm:$0xff]
        %v613 = vld [vmem:[%s9 + $0x8] sm:$0xff]
        %615 = vrot.lane.b32.xlu0 %v609, 112
        %v616 = vpop.permute.xlu0 %615
        %v617 = vsel %vm535, %v616, 0
        %619 = vmatprep.subr.mxu0 0.0
        %620 = vmatpush1.msra.mxu0 0.0
        %621 = vmatprep.subr.mxu0 0.0
        %622 = vmatpush1.msra.mxu0 0.0
        %623 = vmatprep.subr.mxu0 0.0
        %624 = vmatpush1.msra.mxu0 0.0
        %625 = vmatprep.subr.mxu0 0.0
        %626 = vmatpush1.msra.mxu0 0.0
        %627 = vmatprep.subr.mxu0 0.0
        %628 = vmatpush1.msra.mxu0 0.0
        %629 = vmatprep.subr.mxu0 0.0
        %630 = vmatpush1.msra.mxu0 0.0
        %631 = vmatprep.subr.mxu0 0.0
        %632 = vmatpush1.msra.mxu0 0.0
        %633 = vmatprep.subr.mxu0 0.0
        %634 = vmatpush1.msra.mxu0 0.0
        %635 = vmatprep.subr.mxu0 0.0
        %636 = vmatpush1.msra.mxu0 0.0
        %637 = vmatprep.subr.mxu0 0.0
        %638 = vmatpush1.msra.mxu0 0.0
        %639 = vmatprep.subr.mxu0 0.0
        %640 = vmatpush1.msra.mxu0 0.0
        %641 = vmatprep.subr.mxu0 0.0
        %642 = vmatpush1.msra.mxu0 0.0
        %643 = vmatprep.subr.mxu0 0.0
        %644 = vmatpush1.msra.mxu0 0.0
        %645 = vmatprep.subr.mxu0 0.0
        %646 = vmatpush1.msra.mxu0 0.0
        %647 = vmatprep.subr.mxu0 0.0
        %648 = vmatpush1.msra.mxu0 %v613
        %649 = vmatprep.subr.mxu0 0.0
        %650 = vmatpush1.msra.mxu0 %v612
        %651 = vmatprep.subr.mxu0 0.0
        %652 = vmatpush2.msra.mxu0 0.0
        %653 = vmatprep.subr.mxu0 0.0
        %654 = vmatpush2.msra.mxu0 0.0
        %655 = vmatprep.subr.mxu0 0.0
        %656 = vmatpush2.msra.mxu0 0.0
        %657 = vmatprep.subr.mxu0 0.0
        %658 = vmatpush2.msra.mxu0 0.0
        %659 = vmatprep.subr.mxu0 0.0
        %660 = vmatpush2.msra.mxu0 0.0
        %661 = vmatprep.subr.mxu0 0.0
        %662 = vmatpush2.msra.mxu0 0.0
        %663 = vmatprep.subr.mxu0 0.0
        %664 = vmatpush2.msra.mxu0 0.0
        %665 = vmatprep.subr.mxu0 0.0
        %666 = vmatpush2.msra.mxu0 0.0
        %667 = vmatprep.subr.mxu0 0.0
        %668 = vmatpush2.msra.mxu0 0.0
        %669 = vmatprep.subr.mxu0 0.0
        %670 = vmatpush2.msra.mxu0 0.0
        %671 = vmatprep.subr.mxu0 0.0
        %672 = vmatpush2.msra.mxu0 0.0
        %673 = vmatprep.subr.mxu0 0.0
        %674 = vmatpush2.msra.mxu0 0.0
        %675 = vmatprep.subr.mxu0 0.0
        %676 = vmatpush2.msra.mxu0 0.0
        %677 = vmatprep.subr.mxu0 0.0
        %678 = vmatpush2.msra.mxu0 0.0
        %679 = vmatprep.subr.mxu0 0.0
        %680 = vmatpush2.msra.mxu0 0.0
        %681 = vmatprep.subr.mxu0 0.0
        %682 = vmatpush2.msra.mxu0 0.0
        %683 = vmatprep.mubr.f32.mxu0 0.0
        %684 = vmatmul.mubr.f32.gmra.mxu0 %v617
        %v685 = vpop.f32.mrf.mxu0
        %v686 = vadd.f32 0.0, %v685
        %v687 = vpop.f32.mrf.mxu0
        %688 = vdwg.mxu0
        %v690 = vsel %vm535, %v563, 0
        %692 = vmatprep.subr.mxu0 0.0
        %693 = vmatpush1.msra.mxu0 0.0
        %694 = vmatprep.subr.mxu0 0.0
        %695 = vmatpush1.msra.mxu0 0.0
        %696 = vmatprep.subr.mxu0 0.0
        %697 = vmatpush1.msra.mxu0 0.0
        %698 = vmatprep.subr.mxu0 0.0
        %699 = vmatpush1.msra.mxu0 0.0
        %700 = vmatprep.subr.mxu0 0.0
        %701 = vmatpush1.msra.mxu0 0.0
        %702 = vmatprep.subr.mxu0 0.0
        %703 = vmatpush1.msra.mxu0 0.0
        %704 = vmatprep.subr.mxu0 0.0
        %705 = vmatpush1.msra.mxu0 0.0
        %706 = vmatprep.subr.mxu0 0.0
        %707 = vmatpush1.msra.mxu0 0.0
        %708 = vmatprep.subr.mxu0 0.0
        %709 = vmatpush1.msra.mxu0 0.0
        %710 = vmatprep.subr.mxu0 0.0
        %711 = vmatpush1.msra.mxu0 0.0
        %712 = vmatprep.subr.mxu0 0.0
        %713 = vmatpush1.msra.mxu0 0.0
        %714 = vmatprep.subr.mxu0 0.0
        %715 = vmatpush1.msra.mxu0 0.0
        %716 = vmatprep.subr.mxu0 0.0
        %717 = vmatpush1.msra.mxu0 0.0
        %718 = vmatprep.subr.mxu0 0.0
        %719 = vmatpush1.msra.mxu0 0.0
        %720 = vmatprep.subr.mxu0 0.0
        %721 = vmatpush1.msra.mxu0 %v611
        %722 = vmatprep.subr.mxu0 0.0
        %723 = vmatpush1.msra.mxu0 %v610
        %724 = vmatprep.subr.mxu0 0.0
        %725 = vmatpush2.msra.mxu0 0.0
        %726 = vmatprep.subr.mxu0 0.0
        %727 = vmatpush2.msra.mxu0 0.0
        %728 = vmatprep.subr.mxu0 0.0
        %729 = vmatpush2.msra.mxu0 0.0
        %730 = vmatprep.subr.mxu0 0.0
        %731 = vmatpush2.msra.mxu0 0.0
        %732 = vmatprep.subr.mxu0 0.0
        %733 = vmatpush2.msra.mxu0 0.0
        %734 = vmatprep.subr.mxu0 0.0
        %735 = vmatpush2.msra.mxu0 0.0
        %736 = vmatprep.subr.mxu0 0.0
        %737 = vmatpush2.msra.mxu0 0.0
        %738 = vmatprep.subr.mxu0 0.0
        %739 = vmatpush2.msra.mxu0 0.0
        %740 = vmatprep.subr.mxu0 0.0
        %741 = vmatpush2.msra.mxu0 0.0
        %742 = vmatprep.subr.mxu0 0.0
        %743 = vmatpush2.msra.mxu0 0.0
        %744 = vmatprep.subr.mxu0 0.0
        %745 = vmatpush2.msra.mxu0 0.0
        %746 = vmatprep.subr.mxu0 0.0
        %747 = vmatpush2.msra.mxu0 0.0
        %748 = vmatprep.subr.mxu0 0.0
        %749 = vmatpush2.msra.mxu0 0.0
        %750 = vmatprep.subr.mxu0 0.0
        %751 = vmatpush2.msra.mxu0 0.0
        %752 = vmatprep.subr.mxu0 0.0
        %753 = vmatpush2.msra.mxu0 0.0
        %754 = vmatprep.subr.mxu0 0.0
        %755 = vmatpush2.msra.mxu0 0.0
        %756 = vmatprep.mubr.f32.mxu0 0.0
        %757 = vmatmul.mubr.f32.gmra.mxu0 %v690
        %v758 = vpop.f32.mrf.mxu0
        %v759 = vadd.f32 %v686, %v758
        %v760 = vpop.f32.mrf.mxu0
        %761 = vdwg.mxu0
        %v762 = vld [vmem:[%s10] sm:$0x1]
        %v764 = vlaneseq
        %v765 = vshrl.u32 %v764, 7
        %v766 = vsub.s32 0, %v765
        %v767 = vrot.slane %v762, %v766
        %v769 = vadd.f32 %v759, %v767
        %770 = vst [vmem:[%s427] sm:$0xff] %v769
      $region72: #{multi_path_decoder.1} parent=63 // pred_fallthru
        _
      %p771 = scmp.lt.s32.totalorder %s27, 1
      %s772 = scalar_select %p771, %s27, 1
      %s773 = smul.addr %s772, 8
      %s774 = scalar_lea.vmem %s11, %s773
      // Predicated region
      $region73: #{multi_path_decoder.1} parent=63 // pred_check
        %p775 = pneg %p296
      $region74: #{multi_path_decoder.1} parent=63 // pred_check_branch
        %777 = sbr.rel (%p775) target = $region76
      $region75: #{multi_path_decoder.1} parent=63 // pred_region
        _
      $region76: #{multi_path_decoder.1} parent=63 // pred_fallthru
        _
    $region64: #{multi_path_decoder.1} parent=5 // pred_fallthru
      _
    %p778 = scmp.le.s32.totalorder 2, %s18
    // Predicated region
    $region77: #{multi_path_decoder.1} parent=5 // pred_check
      %p779 = pneg %p778
    $region78: #{multi_path_decoder.1} parent=5 // pred_check_branch
      %781 = sbr.rel (%p779) target = $region80
    $region79: #{multi_path_decoder.1} parent=5 // pred_region
      %s782 = ssub.s32 %s18, 2
      // Predicated region
      $region81: #{multi_path_decoder.1} parent=79 // pred_check
        %p783 = pneg %p302
      $region82: #{multi_path_decoder.1} parent=79 // pred_check_branch
        %785 = sbr.rel (%p783) target = $region84
      $region83: #{multi_path_decoder.1} parent=79 // pred_region
        %p786 = scmp.lt.s32.totalorder %s29, 1
        %s787 = scalar_select %p786, %s29, 1
        %s788 = smul.addr %s787, 8
        %s789 = scalar_lea.vmem %s11, %s788
      $region84: #{multi_path_decoder.1} parent=79 // pred_fallthru
        _
    $region80: #{multi_path_decoder.1} parent=5 // pred_fallthru
      _
  $region6: #{multi_path_decoder.1} parent=0 // loop_footer
    %s22 = sadd.s32 1, %s18
  $region7: #{multi_path_decoder.1} parent=0 // loop_footer_branch
    %17 = sbr.rel target = $region3
  $region8: #{multi_path_decoder.1} parent=0 // loop_exit
    _

</llo_original>
